<compile_context>
chip_gen: v5e
topology: v5e:2x2
jax: 0.10.0
libtpu: 0.0.40
codegen_flags: <defaults>
</compile_context>

<pallas_src>
import numpy as np
import jax
import jax.numpy as jnp
from jax.experimental import pallas as pl
from jax.experimental.pallas import tpu as pltpu

# ----------------------------- model config ---------------------------------
NUM_DENSE = 13            # feature_sizes[:13] must be 1 for nn.Linear(fs, E)(x[N,1])
NUM_CAT = 26              # feature_sizes[13:40]
FIELD = NUM_DENSE + NUM_CAT            # 39 fields
EMB = 4                                # embedding_size
FE = FIELD * EMB                       # 156 = deep input dim
FE_PAD = 160                           # FE rounded up to a multiple of 8 sublanes
H1, H2 = 32, 32                        # hidden_dims (num_classes layer never built by the module)
CAT_VOCAB = 8                          # vocab size for every categorical field
BN_EPS = 1e-5
N_BATCH = 8


def _round_up(x, m):
    return (x + m - 1) // m * m


# ------------------------------ Pallas kernel -------------------------------
def deepfm_kernel(lin_ref, e2_ref, wlin_ref, wsq_ref, o_ref):
    """One batch tile:
       lin_ref : (1, TM)       f32  = fm_first_order sum + deep-path constant
       e2_ref  : (FE_PAD, TM)  bf16 = second-order embeddings, feature-major
       wlin_ref: (1+EMB, FE_PAD) bf16 resident weight
                  row 0        -> collapsed affine deep-path direction d
                  rows 1..EMB  -> tiled identity (per-dim field sums of emb2)
       wsq_ref : (1, FE_PAD)   bf16 resident -0.5*ones (sum-of-squares term)
    """
    e2 = e2_ref[...]                                                   # (FE_PAD, TM) bf16

    ylin = jnp.dot(wlin_ref[...], e2, preferred_element_type=jnp.float32)      # (1+EMB, TM)
    yq = jnp.dot(wsq_ref[...], e2 * e2, preferred_element_type=jnp.float32)    # (1, TM)

    deep = ylin[0:1, :]                                                # (1, TM) deep-path dot
    s = ylin[1:1 + EMB, :]                                             # (EMB, TM) field sums
    total = lin_ref[...] + deep + yq + 0.5 * jnp.sum(s * s, axis=0, keepdims=True)
    o_ref[...] = jax.nn.sigmoid(total)                                 # lane-dense (1, TM) f32 store


# ------------------------------ JAX glue -------------------------------------
def field_embeddings(Xi, Xv, w_dense, b_dense, tables):
    """Per-field embeddings, scaled by Xv, shape (N, FIELD, EMB)."""
    xi_dense = Xi[:, :NUM_DENSE, 0]                                    # (N, 13)
    dense = xi_dense[:, :, None] * w_dense[None] + b_dense[None]       # (N, 13, E)
    idx = Xi[:, NUM_DENSE:, 0].astype(jnp.int32)                       # (N, 26)
    cat = tables[jnp.arange(NUM_CAT)[None, :], idx]                    # (N, 26, E)
    return jnp.concatenate([dense, cat], axis=1) * Xv[:, :, None]      # (N, 39, E)


def _fold_reduction_weights(p):
    """Fold BN + affine deep path + FM reductions into two small bf16 weight tiles."""
    # BatchNorm (inference, running stats) folded into the linear layers.
    s1 = p["g1"] * jax.lax.rsqrt(p["v1"] + BN_EPS)                     # (1, H1)
    W1f = p["W1"] * s1                                                 # (FE, H1)
    b1f = (p["b1"] - p["m1"]) * s1 + p["beta1"]                        # (1, H1)
    s2 = p["g2"] * jax.lax.rsqrt(p["v2"] + BN_EPS)                     # (1, H2)
    W2f = p["W2"] * s2                                                 # (H1, H2)
    b2f = (p["b2"] - p["m2"]) * s2 + p["beta2"]                        # (1, H2)

    # Deep path is purely affine (no activation in the reference module), so
    # sum(deep_out, axis=1) == emb2 @ d + c exactly (eval mode).
    v = W2f @ jnp.ones((H2, 1), jnp.float32)                           # (H1, 1)
    d = (W1f @ v)[:, 0]                                                # (FE,)
    c = (b1f @ v)[0, 0] + jnp.sum(b2f)                                 # scalar

    pad = FE_PAD - FE
    zpad = jnp.zeros((pad,), jnp.float32)
    row_d = jnp.concatenate([d, zpad])[None, :]                        # (1, FE_PAD)
    At = jnp.tile(jnp.eye(EMB, dtype=jnp.float32), (1, FIELD))         # (EMB, FE)
    rows_s = jnp.concatenate([At, jnp.zeros((EMB, pad), jnp.float32)], axis=1)   # (EMB, FE_PAD)
    wlin = jnp.concatenate([row_d, rows_s], axis=0).astype(jnp.bfloat16)         # (1+EMB, FE_PAD)
    wsq = jnp.concatenate([-0.5 * jnp.ones((FE,), jnp.float32), zpad])[None, :]
    wsq = wsq.astype(jnp.bfloat16)                                     # (1, FE_PAD)
    return wlin, wsq, c


def deepfm_forward(Xi, Xv, p, tile_n=4096):
    n = Xi.shape[0]
    emb1 = field_embeddings(Xi, Xv, p["w1_dense"], p["b1_dense"], p["emb1_tables"])  # (N, 39, E)
    emb2 = field_embeddings(Xi, Xv, p["w2_dense"], p["b2_dense"], p["emb2_tables"])  # (N, 39, E)

    wlin, wsq, c = _fold_reduction_weights(p)

    tm = min(tile_n, _round_up(n, 128))       # lane-dim tile; >=128 and 128-aligned
    n_pad = _round_up(n, tm)

    # FM first-order term pre-reduced on host; deep-path constant folded in. f32, one row.
    lin = emb1.sum(axis=(1, 2)) + c                                    # (N,)
    lin = jnp.pad(lin, (0, n_pad - n))[None, :]                        # (1, N_pad) f32

    # Second-order embeddings: cast to bf16 BEFORE the relayout, feature-major, zero-padded.
    e2t = emb2.reshape(n, FE).astype(jnp.bfloat16).T                   # (FE, N) bf16
    e2t = jnp.pad(e2t, ((0, FE_PAD - FE), (0, n_pad - n)))             # (FE_PAD, N_pad)

    out = pl.pallas_call(
        deepfm_kernel,
        out_shape=jax.ShapeDtypeStruct((1, n_pad), jnp.float32),
        grid=(n_pad // tm,),
        in_specs=[
            pl.BlockSpec((1, tm), lambda i: (0, i)),                   # fm1 sum + c (f32 row)
            pl.BlockSpec((FE_PAD, tm), lambda i: (0, i)),              # emb2_T tile (bf16)
            pl.BlockSpec((1 + EMB, FE_PAD), lambda i: (0, 0)),         # resident fused weight
            pl.BlockSpec((1, FE_PAD), lambda i: (0, 0)),               # resident -0.5*ones
        ],
        out_specs=pl.BlockSpec((1, tm), lambda i: (0, i)),             # lane-dense output row
        compiler_params=pltpu.CompilerParams(
            # "parallel" lets the batch axis shard across TensorCores on multi-TC chips.
            dimension_semantics=("parallel",)),
    )(lin, e2t, wlin, wsq)
    return out[0, :n]


def deepfm_reference(Xi, Xv, p):
    n = Xi.shape[0]
    emb1 = field_embeddings(Xi, Xv, p["w1_dense"], p["b1_dense"], p["emb1_tables"])
    emb2 = field_embeddings(Xi, Xv, p["w2_dense"], p["b2_dense"], p["emb2_tables"])
    fm1_sum = emb1.sum(axis=(1, 2))
    s = emb2.sum(axis=1)                       # (N, EMB)
    ss = (emb2 * emb2).sum(axis=1)             # (N, EMB)
    fm2 = 0.5 * (s * s - ss)                   # (N, EMB)
    h = emb2.reshape(n, FE) @ p["W1"] + p["b1"]
    h = (h - p["m1"]) / jnp.sqrt(p["v1"] + BN_EPS) * p["g1"] + p["beta1"]
    h = h @ p["W2"] + p["b2"]
    h = (h - p["m2"]) / jnp.sqrt(p["v2"] + BN_EPS) * p["g2"] + p["beta2"]
    total = fm1_sum + fm2.sum(axis=1) + h.sum(axis=1)
    return jax.nn.sigmoid(total)


def init_params(key):
    ks = jax.random.split(key, 16)
    sc = 0.1
    return {
        "w1_dense": sc * jax.random.normal(ks[0], (NUM_DENSE, EMB), jnp.float32),
        "b1_dense": sc * jax.random.normal(ks[1], (NUM_DENSE, EMB), jnp.float32),
        "emb1_tables": sc * jax.random.normal(ks[2], (NUM_CAT, CAT_VOCAB, EMB), jnp.float32),
        "w2_dense": sc * jax.random.normal(ks[3], (NUM_DENSE, EMB), jnp.float32),
        "b2_dense": sc * jax.random.normal(ks[4], (NUM_DENSE, EMB), jnp.float32),
        "emb2_tables": sc * jax.random.normal(ks[5], (NUM_CAT, CAT_VOCAB, EMB), jnp.float32),
        "W1": sc * jax.random.normal(ks[6], (FE, H1), jnp.float32),
        "b1": sc * jax.random.normal(ks[7], (1, H1), jnp.float32),
        "g1": 1.0 + sc * jax.random.normal(ks[8], (1, H1), jnp.float32),
        "beta1": sc * jax.random.normal(ks[9], (1, H1), jnp.float32),
        "m1": sc * jax.random.normal(ks[10], (1, H1), jnp.float32),
        "v1": 0.5 + jax.random.uniform(ks[11], (1, H1), jnp.float32),
        "W2": sc * jax.random.normal(ks[12], (H1, H2), jnp.float32),
        "b2": sc * jax.random.normal(ks[13], (1, H2), jnp.float32),
        "g2": 1.0 + sc * jax.random.normal(ks[14], (1, H2), jnp.float32),
        "beta2": sc * jax.random.normal(ks[15], (1, H2), jnp.float32),
        "m2": jnp.zeros((1, H2), jnp.float32),
        "v2": jnp.ones((1, H2), jnp.float32),
    }


if __name__ == "__main__":
    key = jax.random.PRNGKey(0)
    kx, kv, kc, kp, kx2, kv2, kc2 = jax.random.split(key, 7)
    params = init_params(kp)

    # Small batch (single tile).
    xi_dense = jax.random.normal(kx, (N_BATCH, NUM_DENSE, 1), jnp.float32)
    xi_cat = jax.random.randint(kc, (N_BATCH, NUM_CAT, 1), 0, CAT_VOCAB).astype(jnp.float32)
    Xi = jnp.concatenate([xi_dense, xi_cat], axis=1)        # (N, FIELD, 1)
    Xv = jax.random.uniform(kv, (N_BATCH, FIELD), jnp.float32)

    out = jax.block_until_ready(deepfm_forward(Xi, Xv, params))
    ref = jax.block_until_ready(deepfm_reference(Xi, Xv, params))
    assert out.shape == (N_BATCH,)
    # bf16-streamed activations -> looser tolerance than the f32 path (f32 accumulate bounds drift).
    assert np.allclose(np.asarray(out), np.asarray(ref), atol=2e-2, rtol=1e-2), (out, ref)

    # Larger, non-tile-aligned batch with a small explicit tile purely to exercise the
    # multi-tile parallel grid + lane padding path (production batches should use the
    # default tile_n=4096).
    n2 = 300
    xi_dense2 = jax.random.normal(kx2, (n2, NUM_DENSE, 1), jnp.float32)
    xi_cat2 = jax.random.randint(kc2, (n2, NUM_CAT, 1), 0, CAT_VOCAB).astype(jnp.float32)
    Xi2 = jnp.concatenate([xi_dense2, xi_cat2], axis=1)
    Xv2 = jax.random.uniform(kv2, (n2, FIELD), jnp.float32)

    out2 = jax.block_until_ready(deepfm_forward(Xi2, Xv2, params, tile_n=128))
    ref2 = jax.block_until_ready(deepfm_reference(Xi2, Xv2, params))
    assert out2.shape == (n2,)
    assert np.allclose(np.asarray(out2), np.asarray(ref2), atol=2e-2, rtol=1e-2), (out2, ref2)

    print("KERNEL_OK")
</pallas_src>

<mosaic_0001>
module attributes {stable_mosaic.version = 11 : i64} {
  func.func @deepfm_kernel(%arg0: i32, %arg1: memref<1x128xf32, #tpu.memory_space<vmem>>, %arg2: memref<160x128xbf16, #tpu.memory_space<vmem>>, %arg3: memref<5x160xbf16, #tpu.memory_space<vmem>>, %arg4: memref<1x160xbf16, #tpu.memory_space<vmem>>, %arg5: memref<1x128xf32, #tpu.memory_space<vmem>>) attributes {dimension_semantics = [#tpu.dimension_semantics<parallel>], iteration_bounds = array<i64: 1>, scalar_prefetch = 0 : i64, scratch_operands = 0 : i64, tpu.core_type = #tpu.core_type<tc>, window_params = [{transform_indices = @transform_0, window_bounds = array<i64: 1, 128>}, {transform_indices = @transform_1, window_bounds = array<i64: 160, 128>}, {pipeline_mode = #tpu.pipeline_mode<synchronous>, transform_indices = @transform_2, window_bounds = array<i64: 5, 160>}, {pipeline_mode = #tpu.pipeline_mode<synchronous>, transform_indices = @transform_3, window_bounds = array<i64: 1, 160>}, {transform_indices = @transform_4, window_bounds = array<i64: 1, 128>}]} {
    %c0 = arith.constant 0 : index
    %c0_0 = arith.constant 0 : index
    %0 = vector.load %arg2[%c0, %c0_0] : memref<160x128xbf16, #tpu.memory_space<vmem>>, vector<160x128xbf16>
    %c0_1 = arith.constant 0 : index
    %c0_2 = arith.constant 0 : index
    %1 = vector.load %arg3[%c0_1, %c0_2] : memref<5x160xbf16, #tpu.memory_space<vmem>>, vector<5x160xbf16>
    %cst = arith.constant dense<0.000000e+00> : vector<5x128xf32>
    %2 = tpu.matmul %1, %0, %cst {dimension_numbers = #tpu.dot_dimension_numbers<[1], [0], [0], [1], [0, 0, 1, 1], [], []>} : vector<5x160xbf16>, vector<160x128xbf16>, vector<5x128xf32> -> vector<5x128xf32>
    %c0_3 = arith.constant 0 : index
    %c0_4 = arith.constant 0 : index
    %3 = vector.load %arg4[%c0_3, %c0_4] : memref<1x160xbf16, #tpu.memory_space<vmem>>, vector<1x160xbf16>
    %4 = arith.mulf %0, %0 : vector<160x128xbf16>
    %cst_5 = arith.constant dense<0.000000e+00> : vector<1x128xf32>
    %5 = tpu.matmul %3, %4, %cst_5 {dimension_numbers = #tpu.dot_dimension_numbers<[1], [0], [0], [1], [0, 0, 1, 1], [], []>} : vector<1x160xbf16>, vector<160x128xbf16>, vector<1x128xf32> -> vector<1x128xf32>
    %6 = vector.extract_strided_slice %2 {offsets = [0, 0], sizes = [1, 128], strides = [1, 1]} : vector<5x128xf32> to vector<1x128xf32>
    %7 = vector.extract_strided_slice %2 {offsets = [1, 0], sizes = [4, 128], strides = [1, 1]} : vector<5x128xf32> to vector<4x128xf32>
    %c0_6 = arith.constant 0 : index
    %c0_7 = arith.constant 0 : index
    %8 = vector.load %arg1[%c0_6, %c0_7] : memref<1x128xf32, #tpu.memory_space<vmem>>, vector<1x128xf32>
    %9 = arith.addf %8, %6 : vector<1x128xf32>
    %10 = arith.addf %9, %5 : vector<1x128xf32>
    %11 = arith.mulf %7, %7 : vector<4x128xf32>
    %cst_8 = arith.constant dense<0.000000e+00> : vector<128xf32>
    %12 = vector.multi_reduction <add>, %11, %cst_8 [0] : vector<4x128xf32> to vector<128xf32>
    %13 = vector.shape_cast %12 : vector<128xf32> to vector<1x128xf32>
    %cst_9 = arith.constant 5.000000e-01 : f32
    %14 = vector.broadcast %cst_9 : f32 to vector<1x128xf32>
    %15 = arith.mulf %14, %13 : vector<1x128xf32>
    %16 = arith.addf %10, %15 : vector<1x128xf32>
    %17 = arith.negf %16 : vector<1x128xf32>
    %18 = math.exp %17 : vector<1x128xf32>
    %cst_10 = arith.constant 1.000000e+00 : f32
    %19 = vector.broadcast %cst_10 : f32 to vector<1x128xf32>
    %20 = arith.addf %19, %18 : vector<1x128xf32>
    %21 = arith.divf %19, %20 : vector<1x128xf32>
    %c0_11 = arith.constant 0 : index
    %c0_12 = arith.constant 0 : index
    %22 = vector.load %arg5[%c0_11, %c0_12] : memref<1x128xf32, #tpu.memory_space<vmem>>, vector<1x128xf32>
    tpu.vector_store %arg5[%c0_11, %c0_12], %21 {strides = array<i32>} : memref<1x128xf32, #tpu.memory_space<vmem>>, vector<1x128xf32>,
    return
  }
  func.func @transform_0(%arg0: i32) -> (i32, i32) {
    %c0_i32 = arith.constant 0 : i32
    %c0_i32_0 = arith.constant 0 : i32
    return %c0_i32, %arg0 : i32, i32
  }
  func.func @transform_1(%arg0: i32) -> (i32, i32) {
    %c0_i32 = arith.constant 0 : i32
    %c0_i32_0 = arith.constant 0 : i32
    return %c0_i32, %arg0 : i32, i32
  }
  func.func @transform_2(%arg0: i32) -> (i32, i32) {
    %c0_i32 = arith.constant 0 : i32
    %c0_i32_0 = arith.constant 0 : i32
    %c0_i32_1 = arith.constant 0 : i32
    return %c0_i32, %c0_i32_0 : i32, i32
  }
  func.func @transform_3(%arg0: i32) -> (i32, i32) {
    %c0_i32 = arith.constant 0 : i32
    %c0_i32_0 = arith.constant 0 : i32
    %c0_i32_1 = arith.constant 0 : i32
    return %c0_i32, %c0_i32_0 : i32, i32
  }
  func.func @transform_4(%arg0: i32) -> (i32, i32) {
    %c0_i32 = arith.constant 0 : i32
    %c0_i32_0 = arith.constant 0 : i32
    return %c0_i32, %arg0 : i32, i32
  }
}

</mosaic_0001>

<llo_original>
// kernel: tpu_custom_call.1
$region0: #{tpu_custom_call.1}
  #allocation0 [shape = 'u32[]', space=smem, size = 0x4, offset = 0x4, fixed_abs, tag = 'smem constant byte address 0x4 - core index']
  #allocation1 [shape = 'u32[72,128]{1,0:T(1,128)}', space=vmem, size = 0x9000, scoped, tag = 'internal scratch']
  %s0 = inlined_call_operand.hbm [shape: f32[1,128], index: 0, kind: input, shape index: {}]
  %s1 = inlined_call_operand.hbm [shape: bf16[160,128], index: 1, kind: input, shape index: {}]
  %s2 = inlined_call_operand.hbm [shape: bf16[5,160], index: 2, kind: input, shape index: {}]
  %s3 = inlined_call_operand.vmem [shape: bf16[1,160], index: 3, kind: input, shape index: {}]
  %s4 = inlined_call_operand.hbm [shape: f32[1,128], index: 4, kind: output, shape index: {}]
  %s5 = sld [smem:[#allocation0]]
  $region38: #{tpu_custom_call.1} parent=0
    _
  %s7 = ssub.s32 1, %s5
  %s8 = scalar_select 0, %s7, %s5
  $region1: #{tpu_custom_call.1} parent=0
    #allocation2 [shape = 'u8[512]{0}', space=vmem, size = 0x400, scoped, tag = 'input window, operand 0, single buffered']
    #allocation3 [shape = 's32[1]{0}', space=sflag, size = 0x4, scoped, tag = 'scoped memory for tpu_custom_call.1']
    #allocation4 [shape = 's32[1]{0}', space=sflag, size = 0x4, scoped, tag = 'scoped memory for tpu_custom_call.1']
    #allocation5 [shape = 'u8[40960]{0}', space=vmem, size = 0xa000, scoped, tag = 'input window, operand 1, single buffered']
    #allocation6 [shape = 's32[1]{0}', space=sflag, size = 0x4, scoped, tag = 'scoped memory for tpu_custom_call.1']
    #allocation7 [shape = 'u8[4096]{0}', space=vmem, size = 0x1000, scoped, tag = 'input window, operand 2, single buffered']
    #allocation8 [shape = 'u8[512]{0}', space=vmem, size = 0x400, scoped, tag = 'output window, operand 0, single buffered']
    %9 = vsyncpa [#allocation3], 0
    %10 = vsyncpa [#allocation6], 0
    %11 = vsyncpa [#allocation4], 0
    // Predicated region
    $region2: #{tpu_custom_call.1} parent=1 // pred_check
      _
    $region3: #{tpu_custom_call.1} parent=1 // pred_check_branch
      %13 = sbr.rel (0) target = $region5
    $region4: #{tpu_custom_call.1} parent=1 // pred_region
      %15 = vsyncadd [#allocation3], 0
      %s17 = sshll.u32 %s0, 4
      %s18 = int_to_ptr.hbm [resolvable:$true] %s17
      %s19 = sshll.u32 [#allocation2], 4
      %s20 = int_to_ptr.vmem [resolvable:$true] %s19
      %22 = dma.hbm_to_vmem [thread:$0]  %s18, 16, %s20, [#allocation3]
    $region5: #{tpu_custom_call.1} parent=1 // pred_fallthru
      _
    // Predicated region
    $region6: #{tpu_custom_call.1} parent=1 // pred_check
      _
    $region7: #{tpu_custom_call.1} parent=1 // pred_check_branch
      %24 = sbr.rel (0) target = $region9
    $region8: #{tpu_custom_call.1} parent=1 // pred_region
      %26 = vsyncadd [#allocation6], 0
      %s27 = sshll.u32 %s1, 4
      %s28 = int_to_ptr.hbm [resolvable:$true] %s27
      %s29 = sshll.u32 [#allocation5], 4
      %s30 = int_to_ptr.vmem [resolvable:$true] %s29
      %35 = dma.hbm_to_vmem [thread:$0]  %s28, 1280, %s30, [#allocation6], 64, 64, 4
    $region9: #{tpu_custom_call.1} parent=1 // pred_fallthru
      _
    // Predicated region
    $region10: #{tpu_custom_call.1} parent=1 // pred_check
      _
    $region11: #{tpu_custom_call.1} parent=1 // pred_check_branch
      %37 = sbr.rel (0) target = $region13
    $region12: #{tpu_custom_call.1} parent=1 // pred_region
      %39 = vsyncadd [#allocation6], 0
      %s41 = sshll.u32 %s2, 4
      %s42 = int_to_ptr.hbm [resolvable:$true] %s41
      %s43 = sshll.u32 [#allocation7], 4
      %s44 = int_to_ptr.vmem [resolvable:$true] %s43
      %46 = dma.hbm_to_vmem [thread:$0]  %s42, 128, %s44, [#allocation6]
    $region13: #{tpu_custom_call.1} parent=1 // pred_fallthru
      _
    // Predicated region
    $region14: #{tpu_custom_call.1} parent=1 // pred_check
      _
    $region15: #{tpu_custom_call.1} parent=1 // pred_check_branch
      %48 = sbr.rel (0) target = $region17
    $region16: #{tpu_custom_call.1} parent=1 // pred_region
      _
    $region17: #{tpu_custom_call.1} parent=1 // pred_fallthru
      _
    // Predicated region
    $region18: #{tpu_custom_call.1} parent=1 // pred_check
      _
    $region19: #{tpu_custom_call.1} parent=1 // pred_check_branch
      %50 = sbr.rel (0) target = $region21
    $region20: #{tpu_custom_call.1} parent=1 // pred_region
      %52 = dma.done [#allocation3], 16
    $region21: #{tpu_custom_call.1} parent=1 // pred_fallthru
      _
    // Predicated region
    $region22: #{tpu_custom_call.1} parent=1 // pred_check
      _
    $region23: #{tpu_custom_call.1} parent=1 // pred_check_branch
      %54 = sbr.rel (0) target = $region25
    $region24: #{tpu_custom_call.1} parent=1 // pred_region
      %56 = dma.done [#allocation6], 1280
    $region25: #{tpu_custom_call.1} parent=1 // pred_fallthru
      _
    // Predicated region
    $region26: #{tpu_custom_call.1} parent=1 // pred_check
      _
    $region27: #{tpu_custom_call.1} parent=1 // pred_check_branch
      %58 = sbr.rel (0) target = $region29
    $region28: #{tpu_custom_call.1} parent=1 // pred_region
      %60 = dma.done [#allocation6], 128
    $region29: #{tpu_custom_call.1} parent=1 // pred_fallthru
      _
    %v62 = vld [vmem:[#allocation5] sm:$0xf]
    %v63 = vld [vmem:[#allocation5 + $0x4] sm:$0xf]
    %v64 = vld [vmem:[#allocation5 + $0x8] sm:$0xf]
    %v65 = vld [vmem:[#allocation5 + $0xc] sm:$0xf]
    %v66 = vld [vmem:[#allocation5 + $0x10] sm:$0xf]
    %v67 = vld [vmem:[#allocation5 + $0x14] sm:$0xf]
    %v68 = vld [vmem:[#allocation5 + $0x18] sm:$0xf]
    %v69 = vld [vmem:[#allocation5 + $0x1c] sm:$0xf]
    %v70 = vld [vmem:[#allocation5 + $0x20] sm:$0xf]
    %v71 = vld [vmem:[#allocation5 + $0x24] sm:$0xf]
    %v72 = vld [vmem:[#allocation5 + $0x28] sm:$0xf]
    %v73 = vld [vmem:[#allocation5 + $0x2c] sm:$0xf]
    %v74 = vld [vmem:[#allocation5 + $0x30] sm:$0xf]
    %v75 = vld [vmem:[#allocation5 + $0x34] sm:$0xf]
    %v76 = vld [vmem:[#allocation5 + $0x38] sm:$0xf]
    %v77 = vld [vmem:[#allocation5 + $0x3c] sm:$0xf]
    %v78 = vld [vmem:[#allocation5 + $0x40] sm:$0xf]
    %v79 = vld [vmem:[#allocation5 + $0x44] sm:$0xf]
    %v80 = vld [vmem:[#allocation5 + $0x48] sm:$0xf]
    %v81 = vld [vmem:[#allocation5 + $0x4c] sm:$0xf]
    %v82 = vld [vmem:[#allocation7] sm:$0x77]
    %v84 = vunpack.c.l.b16 %v82
    %v85 = vunpack.c.h.b16 %v82
    %v86 = vpack.c.b16 %v84, %v84
    %v87 = vpack.c.b16 %v85, %v85
    %v109 = vunpack.c.l.b16 %v62
    %v110 = vunpack.c.l.b16 %v63
    %v111 = vunpack.c.l.b16 %v64
    %v112 = vunpack.c.l.b16 %v65
    %v113 = vunpack.c.l.b16 %v66
    %v114 = vunpack.c.l.b16 %v67
    %v115 = vunpack.c.l.b16 %v68
    %v116 = vunpack.c.l.b16 %v69
    %v117 = vunpack.c.l.b16 %v70
    %v118 = vunpack.c.l.b16 %v71
    %v119 = vunpack.c.l.b16 %v72
    %v120 = vunpack.c.l.b16 %v73
    %v121 = vunpack.c.l.b16 %v74
    %v122 = vunpack.c.l.b16 %v75
    %v123 = vunpack.c.l.b16 %v76
    %v124 = vunpack.c.l.b16 %v77
    %v125 = vunpack.c.l.b16 %v78
    %v126 = vunpack.c.l.b16 %v79
    %v127 = vunpack.c.l.b16 %v80
    %v128 = vunpack.c.l.b16 %v81
    %v129 = vpack.c.b16 %v110, %v109
    %v130 = vpack.c.b16 %v112, %v111
    %v131 = vpack.c.b16 %v114, %v113
    %v132 = vpack.c.b16 %v116, %v115
    %v133 = vpack.c.b16 %v118, %v117
    %v134 = vpack.c.b16 %v120, %v119
    %v135 = vpack.c.b16 %v122, %v121
    %v136 = vpack.c.b16 %v124, %v123
    %v137 = vpack.c.b16 %v126, %v125
    %v138 = vpack.c.b16 %v128, %v127
    %vm149 = vcmask 261120
    %v151 = vsel %vm149, %v87, 0
    %153 = vmatpush.bf16.msra.mxu0 %v136
    %154 = vmatpush.bf16.msra.mxu0 %v135
    %155 = vmatpush.bf16.msra.mxu0 %v134
    %156 = vmatpush.bf16.msra.mxu0 %v133
    %157 = vmatpush.bf16.msra.mxu0 %v132
    %158 = vmatpush.bf16.msra.mxu0 %v131
    %159 = vmatpush.bf16.msra.mxu0 %v130
    %160 = vmatpush.bf16.msra.mxu0 %v129
    %161 = vmatmul.bf16.gmra.mxu0 %v86
    %v162 = vpop.f32.mrf.mxu0
    %v163 = vadd.f32 0.0, %v162
    %v164 = vpop.f32.mrf.mxu0
    %165 = vdwg.mxu0
    %166 = vmatpush.bf16.msra.mxu0 0
    %167 = vmatpush.bf16.msra.mxu0 0
    %168 = vmatpush.bf16.msra.mxu0 0
    %169 = vmatpush.bf16.msra.mxu0 0
    %170 = vmatpush.bf16.msra.mxu0 0
    %171 = vmatpush.bf16.msra.mxu0 0
    %172 = vmatpush.bf16.msra.mxu0 %v138
    %173 = vmatpush.bf16.msra.mxu0 %v137
    %174 = vmatmul.bf16.gmra.mxu0 %v151
    %v175 = vpop.f32.mrf.mxu0
    %v176 = vadd.f32 %v163, %v175
    %v177 = vpop.f32.mrf.mxu0
    %178 = vdwg.mxu0
    %v179 = vld [vmem:[%s3] sm:$0x3]
    %v180 = vunpack.c.l.bf16 %v62
    %v181 = vunpack.c.l.bf16 %v63
    %v182 = vunpack.c.l.bf16 %v64
    %v183 = vunpack.c.l.bf16 %v65
    %v184 = vunpack.c.l.bf16 %v66
    %v185 = vunpack.c.l.bf16 %v67
    %v186 = vunpack.c.l.bf16 %v68
    %v187 = vunpack.c.l.bf16 %v69
    %v188 = vunpack.c.l.bf16 %v70
    %v189 = vunpack.c.l.bf16 %v71
    %v190 = vunpack.c.l.bf16 %v72
    %v191 = vunpack.c.l.bf16 %v73
    %v192 = vunpack.c.l.bf16 %v74
    %v193 = vunpack.c.l.bf16 %v75
    %v194 = vunpack.c.l.bf16 %v76
    %v195 = vunpack.c.l.bf16 %v77
    %v196 = vunpack.c.l.bf16 %v78
    %v197 = vunpack.c.l.bf16 %v79
    %v198 = vunpack.c.l.bf16 %v80
    %v199 = vunpack.c.l.bf16 %v81
    %v200 = vmul.f32 %v180, %v180
    %v201 = vmul.f32 %v181, %v181
    %v202 = vmul.f32 %v182, %v182
    %v203 = vmul.f32 %v183, %v183
    %v204 = vmul.f32 %v184, %v184
    %v205 = vmul.f32 %v185, %v185
    %v206 = vmul.f32 %v186, %v186
    %v207 = vmul.f32 %v187, %v187
    %v208 = vmul.f32 %v188, %v188
    %v209 = vmul.f32 %v189, %v189
    %v210 = vmul.f32 %v190, %v190
    %v211 = vmul.f32 %v191, %v191
    %v212 = vmul.f32 %v192, %v192
    %v213 = vmul.f32 %v193, %v193
    %v214 = vmul.f32 %v194, %v194
    %v215 = vmul.f32 %v195, %v195
    %v216 = vmul.f32 %v196, %v196
    %v217 = vmul.f32 %v197, %v197
    %v218 = vmul.f32 %v198, %v198
    %v219 = vmul.f32 %v199, %v199
    %v220 = vpack.c.bf16 %v201, %v200
    %v221 = vpack.c.bf16 %v203, %v202
    %v222 = vpack.c.bf16 %v205, %v204
    %v223 = vpack.c.bf16 %v207, %v206
    %v224 = vpack.c.bf16 %v209, %v208
    %v225 = vpack.c.bf16 %v211, %v210
    %v226 = vpack.c.bf16 %v213, %v212
    %v227 = vpack.c.bf16 %v215, %v214
    %v228 = vpack.c.bf16 %v217, %v216
    %v229 = vpack.c.bf16 %v219, %v218
    %231 = vst [vmem:[#allocation1] ss:$9 sm:$0xff] %v179
    %v232 = vld [vmem:[#allocation1] sm:$0xff]
    %v233 = vld [vmem:[#allocation1 + $0x9] sm:$0xff]
    %v235 = vsel %vm149, %v233, 0
    %237 = vmatpush.bf16.msra.mxu0 %v227
    %238 = vmatpush.bf16.msra.mxu0 %v226
    %239 = vmatpush.bf16.msra.mxu0 %v225
    %240 = vmatpush.bf16.msra.mxu0 %v224
    %241 = vmatpush.bf16.msra.mxu0 %v223
    %242 = vmatpush.bf16.msra.mxu0 %v222
    %243 = vmatpush.bf16.msra.mxu0 %v221
    %244 = vmatpush.bf16.msra.mxu0 %v220
    %245 = vmatmul.bf16.gmra.mxu0 %v232
    %v246 = vpop.f32.mrf.mxu0
    %v247 = vadd.f32 0.0, %v246
    %v248 = vpop.f32.mrf.mxu0
    %249 = vdwg.mxu0
    %250 = vmatpush.bf16.msra.mxu0 0
    %251 = vmatpush.bf16.msra.mxu0 0
    %252 = vmatpush.bf16.msra.mxu0 0
    %253 = vmatpush.bf16.msra.mxu0 0
    %254 = vmatpush.bf16.msra.mxu0 0
    %255 = vmatpush.bf16.msra.mxu0 0
    %256 = vmatpush.bf16.msra.mxu0 %v229
    %257 = vmatpush.bf16.msra.mxu0 %v228
    %258 = vmatmul.bf16.gmra.mxu0 %v235
    %v259 = vpop.f32.mrf.mxu0
    %v260 = vadd.f32 %v247, %v259
    %v261 = vpop.f32.mrf.mxu0
    %262 = vdwg.mxu0
    %v263 = vld [vmem:[#allocation2] sm:$0x1]
    %v264 = vadd.f32 %v263, %v176
    %v265 = vadd.f32 %v264, %v260
    %v266 = vmul.f32 %v176, %v176
    %v268 = vrot.slane %v266, 1
    %vm270 = vcmask 1043456
    %v271 = vsel %vm270, %v268, 0.0
    %v272 = vrot.slane %v271, 4
    %v273 = vadd.f32 %v271, %v272
    %v274 = vrot.slane %v273, 2
    %v275 = vadd.f32 %v273, %v274
    %v276 = vrot.slane %v275, 1
    %v277 = vadd.f32 %v275, %v276
    %v278 = vmul.f32 %v277, 0.5
    %v279 = vadd.f32 %v265, %v278
    %v280 = vxor.u32 %v279, 2147483648
    %v281 = vmul.f32 %v280, 1.442695
    %v282 = vpow.pop %v281
    %v283 = vadd.f32 %v282, 1.0
    %v284 = vrcp.pop %v283
    %v285 = vmul.f32 %v283, %v284
    %v286 = vsub.f32 1.0, %v285
    %v287 = vmul.f32 %v284, %v286
    %v288 = vadd.f32 %v284, %v287
    %vm289 = vweird.f32 %v283
    %vm290 = vweird.f32 %v284
    %vm291 = vmor %vm289, %vm290
    %v292 = vsel %vm291, %v284, %v288
    %v293 = vand.u32 2147483647, %v283
    %vm294 = vcmp.eq.f32.partialorder %v293, 8.507059e+37
    %v295 = vand.u32 %v283, 2147483648
    %v296 = vor.u32 1.1754944e-38, %v295
    %v297 = vsel %vm294, %v296, %v292
    %v298 = vmul.f32 1.0, %v297
    %299 = vst [vmem:[#allocation8] sm:$0x1] %v298
    // Predicated region
    $region30: #{tpu_custom_call.1} parent=1 // pred_check
      _
    $region31: #{tpu_custom_call.1} parent=1 // pred_check_branch
      %301 = sbr.rel (0) target = $region33
    $region32: #{tpu_custom_call.1} parent=1 // pred_region
      %303 = vsyncadd [#allocation4], 0
      %s305 = sshll.u32 [#allocation8], 4
      %s306 = int_to_ptr.vmem [resolvable:$true] %s305
      %s307 = sshll.u32 %s4, 4
      %s308 = int_to_ptr.hbm [resolvable:$true] %s307
      %310 = dma.vmem_to_hbm [thread:$0]  %s306, 16, %s308, [#allocation4]
    $region33: #{tpu_custom_call.1} parent=1 // pred_fallthru
      _
    // Predicated region
    $region34: #{tpu_custom_call.1} parent=1 // pred_check
      _
    $region35: #{tpu_custom_call.1} parent=1 // pred_check_branch
      %312 = sbr.rel (0) target = $region37
    $region36: #{tpu_custom_call.1} parent=1 // pred_region
      %314 = dma.done [#allocation4], 16
    $region37: #{tpu_custom_call.1} parent=1 // pred_fallthru
      _
    %315 = vsyncpa [#allocation3], 1
    %316 = vsyncpa [#allocation6], 1
    %317 = vsyncpa [#allocation4], 1

</llo_original>
